<compile_context>
chip_gen: v7x
topology: tpu7x:2x2x1
jax: 0.10.0
libtpu: 0.0.40
codegen_flags: <defaults>
</compile_context>

<pallas_src>
import functools

import jax
import jax.numpy as jnp
from jax.experimental import pallas as pl
from jax.experimental.pallas import tpu as pltpu


def _round_up(x, m):
    return (x + m - 1) // m * m


# --------------------------------------------------------------------------
# Kernel
# --------------------------------------------------------------------------
def _middle_layer_fwd_kernel(bu_err_ref, w_ref, norm_ref, td_err_ref,
                             state_ref, recon_ref,
                             bu_out_ref, state_out_ref, td_out_ref,
                             *, eps_1, eps_2, mxu_dtype):
    f32 = jnp.float32

    bu = bu_err_ref[...]
    w = w_ref[...]
    if mxu_dtype is not None:
        # Large-n_in lever: run the MXU in bf16 with f32 accumulation.
        bu = bu.astype(mxu_dtype)
        w = w.astype(mxu_dtype)
    # MXU: (TB, n_in) @ (n_in, TN) -> (TB, TN) accumulated in f32.
    pred_err = jnp.dot(bu, w, preferred_element_type=f32)

    td = td_err_ref[...].astype(f32)
    state = state_ref[...].astype(f32)
    recon = recon_ref[...].astype(f32)

    pred_err = pred_err + norm_ref[...].astype(f32) * td     # (1,TN) broadcast
    new_state = jnp.maximum(eps_2, state) * pred_err

    # approx=True keeps both reciprocals on the EUP slot (VPU is the busy slot
    # in this elementwise tail); relative error ~1e-3..1e-4.
    inv_r = pl.reciprocal(jnp.maximum(eps_1, recon), approx=True)
    inv_s = pl.reciprocal(jnp.maximum(eps_1, new_state), approx=True)

    bu_out_ref[...] = (new_state * inv_r).astype(bu_out_ref.dtype)
    state_out_ref[...] = new_state.astype(state_out_ref.dtype)
    td_out_ref[...] = (recon * inv_s).astype(td_out_ref.dtype)


# --------------------------------------------------------------------------
# Tiling / VMEM budgeting
# --------------------------------------------------------------------------
def _vmem_budget():
    """Generation-aware VMEM numbers (v5e/v6e: 128 MiB, v7x: 64 MiB/TC)."""
    cap = 64 * 1024 * 1024          # safe fallback on every generation
    try:
        cap = int(pltpu.get_tpu_info().vmem_capacity_bytes)
    except Exception:
        pass
    budget = int(cap * 0.55)        # what the tile chooser may plan for
    limit = int(cap * 0.75)         # Mosaic scoped-VMEM limit (headroom left)
    return budget, limit


def _choose_tiles(B, n_in, N, budget_bytes, row_bytes):
    """Pick (TB, B_pad, TN, N_pad).

    Accounting per grid step (bytes):
      bu_err tile (f32, 2x buffered)        : 8 * TB * n_in
      6 row-stream tiles (in+out, 2x buf)   : 12 * row_bytes * TB * TN
      elementwise temporaries (f32, ~4)     : 16 * TB * TN
      resident weight (f32, counted twice)  : 8 * n_in * TN
      normalizer                            : 8 * TN
    """
    def tb_cap(tn):
        fixed = 8 * n_in * tn + 8 * tn
        per_row = 8 * n_in + (12 * row_bytes + 16) * tn
        return (budget_bytes - fixed) // per_row

    # Prefer the full width: no N padding, no extra HBM copies.  Only block N
    # (multiples of 128 lanes) when the resident weight overflows the budget.
    tn_candidates = [N] + [t for t in (4096, 2048, 1024, 512, 256, 128) if t < N]
    TN = None
    for tn in tn_candidates:
        if tb_cap(tn) >= min(8, B):
            TN = tn
            break
    if TN is None:
        raise ValueError(
            f"MiddleLayer kernel: n_in={n_in}, n_units={N} does not fit the "
            f"VMEM budget ({budget_bytes} bytes) even with 128-lane column "
            f"tiles; reduce the layer width or split the weight externally.")
    n_col = -(-N // TN)
    N_pad = n_col * TN

    max_tb = max(8, min(512, (tb_cap(TN) // 8) * 8))

    if B < 16 and B <= max(8, max_tb):
        # Single block equal to the full batch dim (legal, zero padding).
        TB, B_pad = B, B
    else:
        # >= 2 row blocks (both v7x TensorCores busy); waste < one block-row.
        n_row = max(2, -(-B // max_tb))
        TB = min(max_tb, _round_up(-(-B // n_row), 8))
        B_pad = _round_up(B, TB)
    return TB, B_pad, TN, N_pad


# --------------------------------------------------------------------------
# Wrapper
# --------------------------------------------------------------------------
def middle_layer_forward(bu_err, bu_weights_normalized, normalizer,
                         td_err, state, reconstruction,
                         eps_1=0.01, eps_2=0.0001, *,
                         row_dtype=jnp.float32, matmul_dtype=None):
    """Returns (bu_err_out, new_state, new_td_err), each (B, n_units).

    row_dtype:    dtype of the six (B, n_units) row streams (bf16 halves HBM
                  traffic if the model tolerates it); math stays f32 in-kernel.
    matmul_dtype: optional MXU operand dtype (e.g. jnp.bfloat16) for large n_in.
    state/td_err are aliased to their outputs; donate them (jit donate_argnums)
    for true in-place buffer updates across predictive-coding iterations.
    """
    B, n_in = bu_err.shape
    n_units = bu_weights_normalized.shape[1]
    f32 = jnp.float32
    row_bytes = jnp.dtype(row_dtype).itemsize

    budget, vmem_limit = _vmem_budget()
    TB, B_pad, TN, N_pad = _choose_tiles(B, n_in, n_units, budget, row_bytes)

    def prep(x, rows, cols, dtype):
        if x.dtype != dtype:
            x = x.astype(dtype)
        r, c = x.shape
        if r == rows and c == cols:
            return x                      # common path: no pad, no copy
        return jnp.pad(x, ((0, rows - r), (0, cols - c)))

    bu_err_p = prep(bu_err, B_pad, n_in, f32)
    w_p = prep(bu_weights_normalized, n_in, N_pad, f32)
    norm_p = prep(normalizer.reshape(1, n_units), 1, N_pad, f32)
    td_p = prep(td_err, B_pad, N_pad, row_dtype)
    state_p = prep(state, B_pad, N_pad, row_dtype)
    recon_p = prep(reconstruction, B_pad, N_pad, row_dtype)

    kernel = functools.partial(_middle_layer_fwd_kernel,
                               eps_1=float(eps_1), eps_2=float(eps_2),
                               mxu_dtype=matmul_dtype)

    n_col = N_pad // TN
    n_row = B_pad // TB
    grid = (n_col, n_row)                 # cols outer: weight resident per col

    bu_spec = pl.BlockSpec((TB, n_in), lambda j, i: (i, 0))
    w_spec = pl.BlockSpec((n_in, TN), lambda j, i: (0, j))
    norm_spec = pl.BlockSpec((1, TN), lambda j, i: (0, j))
    row_spec = pl.BlockSpec((TB, TN), lambda j, i: (i, j))

    out = pl.pallas_call(
        kernel,
        grid=grid,
        in_specs=[
            bu_spec,      # bu_err
            w_spec,       # bu_weights_normalized (resident across row steps)
            norm_spec,    # normalizer
            row_spec,     # td_err
            row_spec,     # state
            row_spec,     # reconstruction
        ],
        out_specs=[
            row_spec,     # bu_err out
            row_spec,     # new state
            row_spec,     # new td_err
        ],
        out_shape=[
            jax.ShapeDtypeStruct((B_pad, N_pad), row_dtype),
            jax.ShapeDtypeStruct((B_pad, N_pad), row_dtype),
            jax.ShapeDtypeStruct((B_pad, N_pad), row_dtype),
        ],
        # state -> new_state, td_err -> new_td (in-place buffer semantics when
        # the caller donates un-padded buffers).
        input_output_aliases={4: 1, 3: 2},
        compiler_params=pltpu.CompilerParams(
            dimension_semantics=("parallel", "parallel"),
            vmem_limit_bytes=vmem_limit,
        ),
    )(bu_err_p, w_p, norm_p, td_p, state_p, recon_p)

    bu_out, new_state, new_td = out
    if B_pad != B or N_pad != n_units:
        bu_out = bu_out[:B, :n_units]
        new_state = new_state[:B, :n_units]
        new_td = new_td[:B, :n_units]
    return bu_out, new_state, new_td


def middle_layer_forward_ref(bu_err, w_norm, normalizer, td_err, state,
                             reconstruction, eps_1=0.01, eps_2=0.0001):
    pred_err = bu_err @ w_norm + normalizer * td_err
    new_state = jnp.maximum(eps_2, state) * pred_err
    bu_out = new_state / jnp.maximum(eps_1, reconstruction)
    new_td = reconstruction / jnp.maximum(eps_1, new_state)
    return bu_out, new_state, new_td


if __name__ == "__main__":
    # Small shapes consistent with the torch module.
    batch_size = 4
    n_in = 16
    n_units = 32
    eps_1 = 0.01
    eps_2 = 0.0001

    key = jax.random.PRNGKey(0)
    k_bu, k_in = jax.random.split(key, 2)

    # Parameter / buffer init as in MiddleLayer.__init__ (torch.rand * 0.1).
    bu_weights = jax.random.uniform(k_bu, (n_in, n_units), jnp.float32) * 0.1
    normalizer = 1.0 / (jnp.sum(bu_weights, axis=0, keepdims=True) + 1.0)
    bu_weights_normalized = bu_weights * normalizer

    state = (1.0 / n_units) * jnp.ones((batch_size, n_units), jnp.float32)
    reconstruction = (1.0 / n_units) * jnp.ones((batch_size, n_units), jnp.float32)
    td_err = jnp.zeros((batch_size, n_units), jnp.float32)

    # Forward input: bottom-up error from the previous layer.
    bu_err_in = jax.random.uniform(k_in, (batch_size, n_in), jnp.float32)

    # Pure-JAX reference (exact divides).
    r_bu, r_state, r_td = middle_layer_forward_ref(
        bu_err_in, bu_weights_normalized, normalizer, td_err, state,
        reconstruction, eps_1, eps_2)

    bu_out, new_state, new_td = middle_layer_forward(
        bu_err_in, bu_weights_normalized, normalizer, td_err, state,
        reconstruction, eps_1, eps_2)
    jax.block_until_ready((bu_out, new_state, new_td))

    # Tolerances loosened for the approx (EUP) reciprocal (~1e-3 rel error).
    assert jnp.allclose(bu_out, r_bu, atol=1e-2, rtol=1e-2)
    assert jnp.allclose(new_state, r_state, atol=1e-2, rtol=1e-2)
    assert jnp.allclose(new_td, r_td, atol=1e-2, rtol=1e-2)

    # TODO(synk): clamped / backward / train_weights paths are stateful module
    # methods outside the forward pass and are not implemented here.
    print("KERNEL_OK")
</pallas_src>

<mosaic_0001>
module attributes {stable_mosaic.version = 11 : i64} {
  func.func @_middle_layer_fwd_kernel(%arg0: i32, %arg1: i32, %arg2: memref<4x16xf32, #tpu.memory_space<vmem>>, %arg3: memref<16x32xf32, #tpu.memory_space<vmem>>, %arg4: memref<1x32xf32, #tpu.memory_space<vmem>>, %arg5: memref<4x32xf32, #tpu.memory_space<vmem>>, %arg6: memref<4x32xf32, #tpu.memory_space<vmem>>, %arg7: memref<4x32xf32, #tpu.memory_space<vmem>>, %arg8: memref<4x32xf32, #tpu.memory_space<vmem>>, %arg9: memref<4x32xf32, #tpu.memory_space<vmem>>, %arg10: memref<4x32xf32, #tpu.memory_space<vmem>>) attributes {dimension_semantics = [#tpu.dimension_semantics<parallel>, #tpu.dimension_semantics<parallel>], iteration_bounds = array<i64: 1, 1>, scalar_prefetch = 0 : i64, scratch_operands = 0 : i64, tpu.core_type = #tpu.core_type<tc>, window_params = [{transform_indices = @transform_0, window_bounds = array<i64: 4, 16>}, {transform_indices = @transform_1, window_bounds = array<i64: 16, 32>}, {transform_indices = @transform_2, window_bounds = array<i64: 1, 32>}, {transform_indices = @transform_3, window_bounds = array<i64: 4, 32>}, {transform_indices = @transform_4, window_bounds = array<i64: 4, 32>}, {transform_indices = @transform_5, window_bounds = array<i64: 4, 32>}, {transform_indices = @transform_6, window_bounds = array<i64: 4, 32>}, {transform_indices = @transform_7, window_bounds = array<i64: 4, 32>}, {transform_indices = @transform_8, window_bounds = array<i64: 4, 32>}]} {
    %c0 = arith.constant 0 : index
    %c0_0 = arith.constant 0 : index
    %0 = vector.load %arg2[%c0, %c0_0] : memref<4x16xf32, #tpu.memory_space<vmem>>, vector<4x16xf32>
    %c0_1 = arith.constant 0 : index
    %c0_2 = arith.constant 0 : index
    %1 = vector.load %arg3[%c0_1, %c0_2] : memref<16x32xf32, #tpu.memory_space<vmem>>, vector<16x32xf32>
    %cst = arith.constant dense<0.000000e+00> : vector<4x32xf32>
    %2 = tpu.matmul %0, %1, %cst {dimension_numbers = #tpu.dot_dimension_numbers<[1], [0], [0], [1], [0, 0, 1, 1], [], []>} : vector<4x16xf32>, vector<16x32xf32>, vector<4x32xf32> -> vector<4x32xf32>
    %c0_3 = arith.constant 0 : index
    %c0_4 = arith.constant 0 : index
    %3 = vector.load %arg5[%c0_3, %c0_4] : memref<4x32xf32, #tpu.memory_space<vmem>>, vector<4x32xf32>
    %c0_5 = arith.constant 0 : index
    %c0_6 = arith.constant 0 : index
    %4 = vector.load %arg6[%c0_5, %c0_6] : memref<4x32xf32, #tpu.memory_space<vmem>>, vector<4x32xf32>
    %c0_7 = arith.constant 0 : index
    %c0_8 = arith.constant 0 : index
    %5 = vector.load %arg7[%c0_7, %c0_8] : memref<4x32xf32, #tpu.memory_space<vmem>>, vector<4x32xf32>
    %c0_9 = arith.constant 0 : index
    %c0_10 = arith.constant 0 : index
    %6 = vector.load %arg4[%c0_9, %c0_10] : memref<1x32xf32, #tpu.memory_space<vmem>>, vector<1x32xf32>
    %7 = vector.broadcast %6 : vector<1x32xf32> to vector<4x32xf32>
    %8 = arith.mulf %7, %3 : vector<4x32xf32>
    %9 = arith.addf %2, %8 : vector<4x32xf32>
    %cst_11 = arith.constant 9.99999974E-5 : f32
    %10 = vector.broadcast %cst_11 : f32 to vector<4x32xf32>
    %11 = arith.maximumf %10, %4 : vector<4x32xf32>
    %12 = arith.mulf %11, %9 : vector<4x32xf32>
    %cst_12 = arith.constant 0.00999999977 : f32
    %13 = vector.broadcast %cst_12 : f32 to vector<4x32xf32>
    %14 = arith.maximumf %13, %5 : vector<4x32xf32>
    %15 = tpu.reciprocal %14 {approx = true} : vector<4x32xf32> -> vector<4x32xf32>
    %cst_13 = arith.constant 0.00999999977 : f32
    %16 = vector.broadcast %cst_13 : f32 to vector<4x32xf32>
    %17 = arith.maximumf %16, %12 : vector<4x32xf32>
    %18 = tpu.reciprocal %17 {approx = true} : vector<4x32xf32> -> vector<4x32xf32>
    %19 = arith.mulf %12, %15 : vector<4x32xf32>
    %c0_14 = arith.constant 0 : index
    %c0_15 = arith.constant 0 : index
    %20 = vector.load %arg8[%c0_14, %c0_15] : memref<4x32xf32, #tpu.memory_space<vmem>>, vector<4x32xf32>
    tpu.vector_store %arg8[%c0_14, %c0_15], %19 {strides = array<i32>} : memref<4x32xf32, #tpu.memory_space<vmem>>, vector<4x32xf32>,
    %c0_16 = arith.constant 0 : index
    %c0_17 = arith.constant 0 : index
    %21 = vector.load %arg9[%c0_16, %c0_17] : memref<4x32xf32, #tpu.memory_space<vmem>>, vector<4x32xf32>
    tpu.vector_store %arg9[%c0_16, %c0_17], %12 {strides = array<i32>} : memref<4x32xf32, #tpu.memory_space<vmem>>, vector<4x32xf32>,
    %22 = arith.mulf %5, %18 : vector<4x32xf32>
    %c0_18 = arith.constant 0 : index
    %c0_19 = arith.constant 0 : index
    %23 = vector.load %arg10[%c0_18, %c0_19] : memref<4x32xf32, #tpu.memory_space<vmem>>, vector<4x32xf32>
    tpu.vector_store %arg10[%c0_18, %c0_19], %22 {strides = array<i32>} : memref<4x32xf32, #tpu.memory_space<vmem>>, vector<4x32xf32>,
    return
  }
  func.func @transform_0(%arg0: i32, %arg1: i32) -> (i32, i32) {
    %c0_i32 = arith.constant 0 : i32
    %c0_i32_0 = arith.constant 0 : i32
    return %arg1, %c0_i32 : i32, i32
  }
  func.func @transform_1(%arg0: i32, %arg1: i32) -> (i32, i32) {
    %c0_i32 = arith.constant 0 : i32
    %c0_i32_0 = arith.constant 0 : i32
    return %c0_i32, %arg0 : i32, i32
  }
  func.func @transform_2(%arg0: i32, %arg1: i32) -> (i32, i32) {
    %c0_i32 = arith.constant 0 : i32
    %c0_i32_0 = arith.constant 0 : i32
    return %c0_i32, %arg0 : i32, i32
  }
  func.func @transform_3(%arg0: i32, %arg1: i32) -> (i32, i32) {
    %c0_i32 = arith.constant 0 : i32
    return %arg1, %arg0 : i32, i32
  }
  func.func @transform_4(%arg0: i32, %arg1: i32) -> (i32, i32) {
    %c0_i32 = arith.constant 0 : i32
    return %arg1, %arg0 : i32, i32
  }
  func.func @transform_5(%arg0: i32, %arg1: i32) -> (i32, i32) {
    %c0_i32 = arith.constant 0 : i32
    return %arg1, %arg0 : i32, i32
  }
  func.func @transform_6(%arg0: i32, %arg1: i32) -> (i32, i32) {
    %c0_i32 = arith.constant 0 : i32
    return %arg1, %arg0 : i32, i32
  }
  func.func @transform_7(%arg0: i32, %arg1: i32) -> (i32, i32) {
    %c0_i32 = arith.constant 0 : i32
    return %arg1, %arg0 : i32, i32
  }
  func.func @transform_8(%arg0: i32, %arg1: i32) -> (i32, i32) {
    %c0_i32 = arith.constant 0 : i32
    return %arg1, %arg0 : i32, i32
  }
}

</mosaic_0001>

<llo_original>
// kernel: tpu_custom_call.1
$region0: #{tpu_custom_call.1}
  #allocation0 [shape = 'u32[]', space=smem, size = 0x4, offset = 0x4, fixed_abs, tag = 'smem constant byte address 0x4 - core index']
  #allocation1 [shape = 'u32[144,128]{1,0:T(1,128)}', space=vmem, size = 0x12000, scoped, tag = 'internal scratch']
  %s0 = inlined_call_operand.vmem [shape: f32[4,16], index: 0, kind: input, shape index: {}]
  %s1 = inlined_call_operand.vmem [shape: f32[16,32], index: 1, kind: input, shape index: {}]
  %s2 = inlined_call_operand.vmem [shape: f32[1,32], index: 2, kind: input, shape index: {}]
  %s3 = inlined_call_operand.hbm [shape: f32[4,32], index: 3, kind: input, shape index: {}, may-alias: {3,8}]
  %s4 = inlined_call_operand.hbm [shape: f32[4,32], index: 4, kind: input, shape index: {}, may-alias: {4,7}]
  %s5 = inlined_call_operand.vmem [shape: f32[4,32], index: 5, kind: input, shape index: {}]
  %s6 = inlined_call_operand.hbm [shape: f32[4,32], index: 6, kind: output, shape index: {0}]
  %s7 = inlined_call_operand.hbm [shape: f32[4,32], index: 7, kind: output, shape index: {1}, may-alias: {4,7}]
  %s8 = inlined_call_operand.hbm [shape: f32[4,32], index: 8, kind: output, shape index: {2}, may-alias: {3,8}]
  %9 = xla_tuple %s6, %s7, %s8
  %s10 = sld [smem:[#allocation0]]
  $region58: #{tpu_custom_call.1} parent=0
    _
  %s12 = ssub.s32 1, %s10
  %s13 = scalar_select 0, %s12, %s10
  $region1: #{tpu_custom_call.1} parent=0
    #allocation2 [shape = 'u8[2048]{0}', space=vmem, size = 0x800, scoped, tag = 'input window, operand 3, single buffered']
    #allocation3 [shape = 's32[1]{0}', space=sflag, size = 0x4, scoped, tag = 'scoped memory for tpu_custom_call.1']
    #allocation4 [shape = 's32[1]{0}', space=sflag, size = 0x4, scoped, tag = 'scoped memory for tpu_custom_call.1']
    #allocation5 [shape = 'u8[2048]{0}', space=vmem, size = 0x800, scoped, tag = 'input window, operand 4, single buffered']
    #allocation6 [shape = 's32[1]{0}', space=sflag, size = 0x4, scoped, tag = 'scoped memory for tpu_custom_call.1']
    #allocation7 [shape = 'u8[2048]{0}', space=vmem, size = 0x800, scoped, tag = 'output window, operand 0, single buffered']
    #allocation8 [shape = 'u8[2048]{0}', space=vmem, size = 0x800, scoped, tag = 'output window, operand 1, single buffered']
    #allocation9 [shape = 's32[1]{0}', space=sflag, size = 0x4, scoped, tag = 'scoped memory for tpu_custom_call.1']
    #allocation10 [shape = 'u8[2048]{0}', space=vmem, size = 0x800, scoped, tag = 'output window, operand 2, single buffered']
    %14 = vsyncpa [#allocation3], 0
    %15 = vsyncpa [#allocation6], 0
    %16 = vsyncpa [#allocation4], 0
    %17 = vsyncpa [#allocation9], 0
    // Predicated region
    $region2: #{tpu_custom_call.1} parent=1 // pred_check
      _
    $region3: #{tpu_custom_call.1} parent=1 // pred_check_branch
      %19 = sbr.rel (0) target = $region5
    $region4: #{tpu_custom_call.1} parent=1 // pred_region
      _
    $region5: #{tpu_custom_call.1} parent=1 // pred_fallthru
      _
    // Predicated region
    $region6: #{tpu_custom_call.1} parent=1 // pred_check
      _
    $region7: #{tpu_custom_call.1} parent=1 // pred_check_branch
      %21 = sbr.rel (0) target = $region9
    $region8: #{tpu_custom_call.1} parent=1 // pred_region
      _
    $region9: #{tpu_custom_call.1} parent=1 // pred_fallthru
      _
    // Predicated region
    $region10: #{tpu_custom_call.1} parent=1 // pred_check
      _
    $region11: #{tpu_custom_call.1} parent=1 // pred_check_branch
      %23 = sbr.rel (0) target = $region13
    $region12: #{tpu_custom_call.1} parent=1 // pred_region
      _
    $region13: #{tpu_custom_call.1} parent=1 // pred_fallthru
      _
    // Predicated region
    $region14: #{tpu_custom_call.1} parent=1 // pred_check
      _
    $region15: #{tpu_custom_call.1} parent=1 // pred_check_branch
      %25 = sbr.rel (0) target = $region17
    $region16: #{tpu_custom_call.1} parent=1 // pred_region
      %s27 = ssub.s32 64, 64
      %28 = vsyncadd [#allocation3], %s27
      %s30 = sshll.u32 [#allocation2], 4
      %s31 = int_to_ptr.vmem [resolvable:$true] %s30
      %33 = dma.hbm_to_vmem [thread:$0]  %s3, 64, %s31, [#allocation3]
    $region17: #{tpu_custom_call.1} parent=1 // pred_fallthru
      _
    // Predicated region
    $region18: #{tpu_custom_call.1} parent=1 // pred_check
      _
    $region19: #{tpu_custom_call.1} parent=1 // pred_check_branch
      %35 = sbr.rel (0) target = $region21
    $region20: #{tpu_custom_call.1} parent=1 // pred_region
      %s37 = ssub.s32 64, 64
      %38 = vsyncadd [#allocation6], %s37
      %s40 = sshll.u32 [#allocation5], 4
      %s41 = int_to_ptr.vmem [resolvable:$true] %s40
      %43 = dma.hbm_to_vmem [thread:$0]  %s4, 64, %s41, [#allocation6]
    $region21: #{tpu_custom_call.1} parent=1 // pred_fallthru
      _
    // Predicated region
    $region22: #{tpu_custom_call.1} parent=1 // pred_check
      _
    $region23: #{tpu_custom_call.1} parent=1 // pred_check_branch
      %45 = sbr.rel (0) target = $region25
    $region24: #{tpu_custom_call.1} parent=1 // pred_region
      _
    $region25: #{tpu_custom_call.1} parent=1 // pred_fallthru
      _
    // Predicated region
    $region26: #{tpu_custom_call.1} parent=1 // pred_check
      _
    $region27: #{tpu_custom_call.1} parent=1 // pred_check_branch
      %47 = sbr.rel (0) target = $region29
    $region28: #{tpu_custom_call.1} parent=1 // pred_region
      %48 = dma.done [#allocation3], 64
    $region29: #{tpu_custom_call.1} parent=1 // pred_fallthru
      _
    // Predicated region
    $region30: #{tpu_custom_call.1} parent=1 // pred_check
      _
    $region31: #{tpu_custom_call.1} parent=1 // pred_check_branch
      %50 = sbr.rel (0) target = $region33
    $region32: #{tpu_custom_call.1} parent=1 // pred_region
      %51 = dma.done [#allocation6], 64
    $region33: #{tpu_custom_call.1} parent=1 // pred_fallthru
      _
    %v52 = vld [vmem:[%s0] sm:$0xf]
    %v53 = vld [vmem:[%s1] sm:$0xff]
    %v54 = vld [vmem:[%s1 + $0x8] sm:$0xff]
    %v55 = vld [vmem:[#allocation2] sm:$0xf]
    %v56 = vld [vmem:[#allocation5] sm:$0xf]
    %v57 = vld [vmem:[%s5] sm:$0xf]
    %v58 = vld [vmem:[%s2] sm:$0x1]
    %v60 = vlaneseq
    %v61 = vshrl.u32 %v60, 7
    %v62 = vsub.s32 0, %v61
    %v63 = vrot.slane %v58, %v62
    %v65 = vmul.f32 %v63, %v55
    %vm66 = vcmask 130048
    %v68 = vsel %vm66, %v52, 0
    %70 = vmatprep.subr.mxu0 0.0
    %71 = vmatpush1.msra.mxu0 %v53
    %72 = vmatprep.subr.mxu0 0.0
    %73 = vmatpush1.msra.mxu0 %v54
    %74 = vmatprep.subr.mxu0 0.0
    %75 = vmatpush1.msra.mxu0 0.0
    %76 = vmatprep.subr.mxu0 0.0
    %77 = vmatpush1.msra.mxu0 0.0
    %78 = vmatprep.subr.mxu0 0.0
    %79 = vmatpush1.msra.mxu0 0.0
    %80 = vmatprep.subr.mxu0 0.0
    %81 = vmatpush1.msra.mxu0 0.0
    %82 = vmatprep.subr.mxu0 0.0
    %83 = vmatpush1.msra.mxu0 0.0
    %84 = vmatprep.subr.mxu0 0.0
    %85 = vmatpush1.msra.mxu0 0.0
    %86 = vmatprep.subr.mxu0 0.0
    %87 = vmatpush1.msra.mxu0 0.0
    %88 = vmatprep.subr.mxu0 0.0
    %89 = vmatpush1.msra.mxu0 0.0
    %90 = vmatprep.subr.mxu0 0.0
    %91 = vmatpush1.msra.mxu0 0.0
    %92 = vmatprep.subr.mxu0 0.0
    %93 = vmatpush1.msra.mxu0 0.0
    %94 = vmatprep.subr.mxu0 0.0
    %95 = vmatpush1.msra.mxu0 0.0
    %96 = vmatprep.subr.mxu0 0.0
    %97 = vmatpush1.msra.mxu0 0.0
    %98 = vmatprep.subr.mxu0 0.0
    %99 = vmatpush1.msra.mxu0 0.0
    %100 = vmatprep.subr.mxu0 0.0
    %101 = vmatpush1.msra.mxu0 0.0
    %102 = vmatprep.subr.mxu0 0.0
    %103 = vmatpush1.msra.mxu0 0.0
    %104 = vmatprep.subr.mxu0 0.0
    %105 = vmatpush1.msra.mxu0 0.0
    %106 = vmatprep.subr.mxu0 0.0
    %107 = vmatpush1.msra.mxu0 0.0
    %108 = vmatprep.subr.mxu0 0.0
    %109 = vmatpush1.msra.mxu0 0.0
    %110 = vmatprep.subr.mxu0 0.0
    %111 = vmatpush1.msra.mxu0 0.0
    %112 = vmatprep.subr.mxu0 0.0
    %113 = vmatpush1.msra.mxu0 0.0
    %114 = vmatprep.subr.mxu0 0.0
    %115 = vmatpush1.msra.mxu0 0.0
    %116 = vmatprep.subr.mxu0 0.0
    %117 = vmatpush1.msra.mxu0 0.0
    %118 = vmatprep.subr.mxu0 0.0
    %119 = vmatpush1.msra.mxu0 0.0
    %120 = vmatprep.subr.mxu0 0.0
    %121 = vmatpush1.msra.mxu0 0.0
    %122 = vmatprep.subr.mxu0 0.0
    %123 = vmatpush1.msra.mxu0 0.0
    %124 = vmatprep.subr.mxu0 0.0
    %125 = vmatpush1.msra.mxu0 0.0
    %126 = vmatprep.subr.mxu0 0.0
    %127 = vmatpush1.msra.mxu0 0.0
    %128 = vmatprep.subr.mxu0 0.0
    %129 = vmatpush1.msra.mxu0 0.0
    %130 = vmatprep.subr.mxu0 0.0
    %131 = vmatpush1.msra.mxu0 0.0
    %132 = vmatprep.subr.mxu0 0.0
    %133 = vmatpush1.msra.mxu0 0.0
    %134 = vmatprep.mubr.f32.mxu0 0.0
    %135 = vmatmul.mubr.f32.gmra.mrb[0].mxu0 %v68
    %v136 = vpop.f32.mrb[0].mxu0
    %v137 = vadd.f32 %v65, %v136
    %v138 = vpop.f32.mrb[0].mxu0
    %139 = vdwg.mxu0
    %v140 = vmax.f32 %v56, 0.0001
    %v141 = vmul.f32 %v140, %v137
    %v142 = vmax.f32 %v57, 0.01
    %v143 = vrcp.pop %v142
    %v144 = vmax.f32 %v141, 0.01
    %v145 = vrcp.pop %v144
    %v146 = vmul.f32 %v141, %v143
    %vm147 = vcmask 257024
    %148 = vst.msk [vmem:[#allocation7] sm:$0xf] %vm147, %v146
    %149 = vst.msk [vmem:[#allocation8] sm:$0xf] %vm147, %v141
    %v150 = vmul.f32 %v57, %v145
    %151 = vst.msk [vmem:[#allocation10] sm:$0xf] %vm147, %v150
    // Predicated region
    $region34: #{tpu_custom_call.1} parent=1 // pred_check
      _
    $region35: #{tpu_custom_call.1} parent=1 // pred_check_branch
      %153 = sbr.rel (0) target = $region37
    $region36: #{tpu_custom_call.1} parent=1 // pred_region
      %s155 = ssub.s32 64, 64
      %156 = vsyncadd [#allocation4], %s155
      %s158 = sshll.u32 [#allocation7], 4
      %s159 = int_to_ptr.vmem [resolvable:$true] %s158
      %161 = dma.vmem_to_hbm [thread:$0]  %s159, 64, %s6, [#allocation4]
    $region37: #{tpu_custom_call.1} parent=1 // pred_fallthru
      _
    // Predicated region
    $region38: #{tpu_custom_call.1} parent=1 // pred_check
      _
    $region39: #{tpu_custom_call.1} parent=1 // pred_check_branch
      %163 = sbr.rel (0) target = $region41
    $region40: #{tpu_custom_call.1} parent=1 // pred_region
      %s165 = ssub.s32 64, 64
      %166 = vsyncadd [#allocation9], %s165
      %s168 = sshll.u32 [#allocation8], 4
      %s169 = int_to_ptr.vmem [resolvable:$true] %s168
      %171 = dma.vmem_to_hbm [thread:$0]  %s169, 64, %s7, [#allocation9]
    $region41: #{tpu_custom_call.1} parent=1 // pred_fallthru
      _
    // Predicated region
    $region42: #{tpu_custom_call.1} parent=1 // pred_check
      _
    $region43: #{tpu_custom_call.1} parent=1 // pred_check_branch
      %173 = sbr.rel (0) target = $region45
    $region44: #{tpu_custom_call.1} parent=1 // pred_region
      %s175 = ssub.s32 64, 64
      %176 = vsyncadd [#allocation9], %s175
      %s178 = sshll.u32 [#allocation10], 4
      %s179 = int_to_ptr.vmem [resolvable:$true] %s178
      %181 = dma.vmem_to_hbm [thread:$0]  %s179, 64, %s8, [#allocation9]
    $region45: #{tpu_custom_call.1} parent=1 // pred_fallthru
      _
    // Predicated region
    $region46: #{tpu_custom_call.1} parent=1 // pred_check
      _
    $region47: #{tpu_custom_call.1} parent=1 // pred_check_branch
      %183 = sbr.rel (0) target = $region49
    $region48: #{tpu_custom_call.1} parent=1 // pred_region
      %184 = dma.done [#allocation4], 64
    $region49: #{tpu_custom_call.1} parent=1 // pred_fallthru
      _
    // Predicated region
    $region50: #{tpu_custom_call.1} parent=1 // pred_check
      _
    $region51: #{tpu_custom_call.1} parent=1 // pred_check_branch
      %186 = sbr.rel (0) target = $region53
    $region52: #{tpu_custom_call.1} parent=1 // pred_region
      %187 = dma.done [#allocation9], 64
    $region53: #{tpu_custom_call.1} parent=1 // pred_fallthru
      _
    // Predicated region
    $region54: #{tpu_custom_call.1} parent=1 // pred_check
      _
    $region55: #{tpu_custom_call.1} parent=1 // pred_check_branch
      %189 = sbr.rel (0) target = $region57
    $region56: #{tpu_custom_call.1} parent=1 // pred_region
      %190 = dma.done [#allocation9], 64
    $region57: #{tpu_custom_call.1} parent=1 // pred_fallthru
      _
    %191 = vsyncpa [#allocation3], 1
    %192 = vsyncpa [#allocation6], 1
    %193 = vsyncpa [#allocation4], 1
    %194 = vsyncpa [#allocation9], 1

</llo_original>
